<compile_context>
chip_gen: v7x
topology: tpu7x:2x2x1
jax: 0.10.0
libtpu: 0.0.40
codegen_flags: <defaults>
</compile_context>

<pallas_src>
import jax
import jax.numpy as jnp
from jax import lax
from jax.experimental import pallas as pl
from jax.experimental.pallas import tpu as pltpu


def _round_up(a, m):
    return ((a + m - 1) // m) * m


def _cdiv(a, b):
    return (a + b - 1) // b


def _balanced_tile(n, want, quantum):
    """Balanced tiling of an axis of length n -> (tile, num_tiles).

    If one tile covers the axis, tile == n (block dim equals full array dim, always
    legal).  Otherwise tile is a multiple of `quantum`, tiles are near-equal, and
    only the final tile is partial (handled by masked DMA / in-kernel masking).
    """
    want = max(want, quantum)
    tiles = max(1, _cdiv(n, want))
    if tiles == 1:
        return n, 1
    t = _round_up(_cdiv(n, tiles), quantum)
    tiles = _cdiv(n, t)
    if tiles == 1:
        return n, 1
    return t, tiles


def gcn_layer_m1(S, x, W, b=None, *, tm=512, tk=1024,
                 compute_dtype=jnp.bfloat16, out_dtype=jnp.float32):
    """y = S @ x @ W (+ b).  S:(N,N), x:(N,Fin), W:(Fin,Fout), b:(Fout,) or None.

    S is streamed in its native dtype (pass bf16 S to halve its HBM traffic — S is
    layer-invariant in a GCN so it can be cast once, outside).
    """
    assert x.ndim == 2, "only the 2-D input branch of GCNLayerM1 is implemented"
    N, Ncols = S.shape
    assert N == Ncols, "graph shift operator S must be square"
    Fin, Fout = W.shape
    assert x.shape == (N, Fin)

    fin_pad = _round_up(Fin, 128)
    fout_pad = _round_up(Fout, 128)

    # Matmul association by shape: keep the *smaller* feature dim as the inner factor
    # of the O(N^2) propagation matmul.
    apply_w_in_kernel = Fout > Fin          # branch 1: (S@x)@W ; branch 2: S@(x@W)
    f_inner = fin_pad if apply_w_in_kernel else fout_pad

    s_itemsize = jnp.dtype(S.dtype).itemsize
    c_itemsize = jnp.dtype(compute_dtype).itemsize
    out_itemsize = jnp.dtype(out_dtype).itemsize

    # ---- balanced tiling; keep >= 2 row tiles so v7x's two TensorCores both work ----
    want_rows = tm
    if _cdiv(N, tm) < 2 and N >= 128:
        want_rows = _round_up(_cdiv(N, 2), 16)
    tm_eff, n_row_tiles = _balanced_tile(N, want_rows, 16)
    tk_eff, k_tiles = _balanced_tile(N, tk, 128)

    # ---- VMEM budgeting (fit under every generation's scoped default) --------------
    VMEM_BUDGET = 26 * 1024 * 1024

    def _vmem_need(tm_e, tk_e, k_t, x_res):
        need = 2 * tm_e * tk_e * s_itemsize                                   # S (dbl buf)
        need += 2 * (k_t * tk_e if x_res else tk_e) * f_inner * c_itemsize    # x / z
        need += 2 * tm_e * fout_pad * out_itemsize                            # output
        need += 2 * fout_pad * 4                                              # bias
        if apply_w_in_kernel:
            need += 2 * fin_pad * fout_pad * c_itemsize                       # resident W
            need += tm_e * fin_pad * 4                                        # f32 acc
        return need

    x_resident = k_tiles * tk_eff * f_inner * c_itemsize <= 8 * 1024 * 1024
    while _vmem_need(tm_eff, tk_eff, k_tiles, x_resident) > VMEM_BUDGET:
        if tk_eff > 512:
            tk_eff, k_tiles = _balanced_tile(N, tk_eff // 2, 128)
        elif x_resident:
            x_resident = False
        elif tm_eff > 128:
            tm_eff, n_row_tiles = _balanced_tile(N, tm_eff // 2, 16)
        else:
            break  # see TODO(synk) about tiling Fout for enormous W

    vmem_need = _vmem_need(tm_eff, tk_eff, k_tiles, x_resident)
    vmem_limit = int(min(max(vmem_need + 4 * 1024 * 1024, 32 * 1024 * 1024),
                         48 * 1024 * 1024))

    k_pad = k_tiles * tk_eff
    k_tail = N - (k_tiles - 1) * tk_eff
    need_k_mask = (k_tiles > 1) and (k_tail < tk_eff)

    # ---- small operands (cheap vs. the S stream) ------------------------------------
    if apply_w_in_kernel:
        xz = x.astype(compute_dtype)                      # (N, Fin)
        f_valid = Fin
        w_p = jnp.zeros((fin_pad, fout_pad), compute_dtype).at[:Fin, :Fout].set(
            W.astype(compute_dtype))
    else:
        # Hoist the tiny feature transform z = x @ W once (bf16 MXU, f32 accumulate).
        xz = jnp.dot(x.astype(compute_dtype), W.astype(compute_dtype),
                     preferred_element_type=jnp.float32).astype(compute_dtype)
        f_valid = Fout
    xz_p = jnp.zeros((k_pad, f_inner), compute_dtype).at[:N, :f_valid].set(xz)

    b_vec = jnp.zeros((Fout,), jnp.float32) if b is None else b.astype(jnp.float32)
    b_p = jnp.zeros((1, fout_pad), jnp.float32).at[0, :Fout].set(b_vec)

    # ---- kernel helpers (statics captured by closure) -------------------------------
    def s_tile(s_ref, k):
        s = s_ref[...]
        if s.dtype != compute_dtype:
            s = s.astype(compute_dtype)          # cast in-kernel: no extra HBM pass
        if need_k_mask:
            # Zero the K-tail of the (only) partial tile so OOB garbage never enters
            # the reduction.  For k < last, (N - k*tk_eff) >= tk_eff -> no-op mask.
            col = lax.broadcasted_iota(jnp.int32, s.shape, 1)
            s = jnp.where(col < (N - k * tk_eff), s, jnp.zeros_like(s))
        return s

    def xz_block(xz_ref, k):
        if x_resident:
            if k_tiles == 1:
                return xz_ref[...]
            off = pl.multiple_of(k * tk_eff, 128)
            return xz_ref[pl.ds(off, tk_eff), :]
        return xz_ref[...]

    s_spec = pl.BlockSpec((tm_eff, tk_eff), lambda i, k: (i, k))
    xz_spec = (pl.BlockSpec((k_pad, f_inner), lambda i, k: (0, 0)) if x_resident
               else pl.BlockSpec((tk_eff, f_inner), lambda i, k: (k, 0)))
    b_spec = pl.BlockSpec((1, fout_pad), lambda i, k: (0, 0))
    out_spec = pl.BlockSpec((tm_eff, fout_pad), lambda i, k: (i, 0))

    compiler_params = pltpu.CompilerParams(
        dimension_semantics=("parallel", "arbitrary"),
        vmem_limit_bytes=vmem_limit)

    grid = (n_row_tiles, k_tiles)
    xz_reads = 1 if x_resident else n_row_tiles

    if apply_w_in_kernel:
        # ------------------ branch 1: accumulate S@x, apply W + b at finalize -------
        def kernel(s_ref, xz_ref, w_ref, b_ref, o_ref, acc_ref):
            k = pl.program_id(1)

            @pl.when(k == 0)
            def _():
                acc_ref[...] = jnp.zeros_like(acc_ref)

            acc_ref[...] += jnp.dot(s_tile(s_ref, k), xz_block(xz_ref, k),
                                    preferred_element_type=jnp.float32)

            @pl.when(k == k_tiles - 1)
            def _():
                # Feature mix on the MXU in bf16 (f32 accumulation), bias in f32.
                y = jnp.dot(acc_ref[...].astype(compute_dtype), w_ref[...],
                            preferred_element_type=jnp.float32) + b_ref[...]
                o_ref[...] = y.astype(o_ref.dtype)

        cost = pl.CostEstimate(
            flops=int(2 * N * N * fin_pad + 2 * N * fin_pad * fout_pad),
            transcendentals=0,
            bytes_accessed=int(N * N * s_itemsize
                               + xz_reads * xz_p.size * c_itemsize
                               + w_p.size * c_itemsize + b_p.size * 4
                               + N * fout_pad * out_itemsize))
        y_p = pl.pallas_call(
            kernel,
            out_shape=jax.ShapeDtypeStruct((N, fout_pad), out_dtype),
            grid_spec=pltpu.PrefetchScalarGridSpec(
                num_scalar_prefetch=0, grid=grid,
                in_specs=[s_spec, xz_spec,
                          pl.BlockSpec((fin_pad, fout_pad), lambda i, k: (0, 0)),
                          b_spec],
                out_specs=out_spec,
                scratch_shapes=[pltpu.VMEM((tm_eff, fin_pad), jnp.float32)]),
            compiler_params=compiler_params,
            cost_estimate=cost,
        )(S, xz_p, w_p, b_p)
    else:
        # ------------------ branch 2: accumulate S@(xW) directly into the output ----
        acc_in_out = jnp.dtype(out_dtype) == jnp.dtype(jnp.float32)

        if acc_in_out:
            def kernel(s_ref, xz_ref, b_ref, o_ref):
                k = pl.program_id(1)

                @pl.when(k == 0)
                def _():
                    o_ref[...] = jnp.zeros_like(o_ref)

                o_ref[...] += jnp.dot(s_tile(s_ref, k), xz_block(xz_ref, k),
                                      preferred_element_type=jnp.float32)

                @pl.when(k == k_tiles - 1)
                def _():
                    o_ref[...] += b_ref[...]

            scratch_shapes = []
        else:
            def kernel(s_ref, xz_ref, b_ref, o_ref, acc_ref):
                k = pl.program_id(1)

                @pl.when(k == 0)
                def _():
                    acc_ref[...] = jnp.zeros_like(acc_ref)

                acc_ref[...] += jnp.dot(s_tile(s_ref, k), xz_block(xz_ref, k),
                                        preferred_element_type=jnp.float32)

                @pl.when(k == k_tiles - 1)
                def _():
                    o_ref[...] = (acc_ref[...] + b_ref[...]).astype(o_ref.dtype)

            scratch_shapes = [pltpu.VMEM((tm_eff, fout_pad), jnp.float32)]

        cost = pl.CostEstimate(
            flops=int(2 * N * N * fout_pad),
            transcendentals=0,
            bytes_accessed=int(N * N * s_itemsize
                               + xz_reads * xz_p.size * c_itemsize + b_p.size * 4
                               + N * fout_pad * out_itemsize))
        y_p = pl.pallas_call(
            kernel,
            out_shape=jax.ShapeDtypeStruct((N, fout_pad), out_dtype),
            grid_spec=pltpu.PrefetchScalarGridSpec(
                num_scalar_prefetch=0, grid=grid,
                in_specs=[s_spec, xz_spec, b_spec],
                out_specs=out_spec,
                scratch_shapes=scratch_shapes),
            compiler_params=compiler_params,
            cost_estimate=cost,
        )(S, xz_p, b_p)

    return y_p if fout_pad == Fout else y_p[:, :Fout]


if __name__ == "__main__":
    key = jax.random.PRNGKey(0)
    ks = jax.random.split(key, 4)

    def make_case(k, N, Fin, Fout):
        k_s, k_x, k_w = jax.random.split(k, 3)
        # Graph shift operator S (N, N) — symmetric, row-normalized-ish.
        A = (jax.random.uniform(k_s, (N, N)) > 0.7).astype(jnp.float32)
        A = jnp.maximum(A, A.T)
        S = A / (jnp.sum(A, axis=1, keepdims=True) + 1.0)
        x = jax.random.normal(k_x, (N, Fin), dtype=jnp.float32)
        # Kaiming-uniform-style init for W, zero bias (matches init.constant_(0.0)).
        bound = jnp.sqrt(6.0 / Fin)
        W = jax.random.uniform(k_w, (Fin, Fout), minval=-bound, maxval=bound,
                               dtype=jnp.float32)
        b = jnp.zeros((Fout,), dtype=jnp.float32)
        return S, x, W, b

    def ref_fwd(S, x, W, b):
        # Reference with the same bf16 rounding the kernel applies.
        bf = lambda a: a.astype(jnp.bfloat16)
        Fin, Fout = W.shape
        if Fout > Fin:
            acc = jnp.dot(bf(S), bf(x), preferred_element_type=jnp.float32)
            y = jnp.dot(bf(acc), bf(W), preferred_element_type=jnp.float32)
        else:
            z = jnp.dot(bf(x), bf(W),
                        preferred_element_type=jnp.float32).astype(jnp.bfloat16)
            y = jnp.dot(bf(S), z, preferred_element_type=jnp.float32)
        return y + b[None, :]

    def check(S, x, W, b, **kw):
        y = jax.block_until_ready(gcn_layer_m1(S, x, W, b, **kw))
        y_ref = ref_fwd(S, x, W, b)
        assert y.shape == y_ref.shape, (y.shape, y_ref.shape)
        err = float(jnp.max(jnp.abs(y - y_ref)))
        assert jnp.allclose(y, y_ref, atol=2e-2, rtol=2e-2), err
        return y

    # Case 1: Fout > Fin  -> in-kernel (S@x)@W, 2 row tiles, single (full) K tile.
    check(*make_case(ks[0], 384, 48, 96))
    # Case 2: Fout <= Fin -> hoisted x@W, direct accumulation into the output block.
    check(*make_case(ks[1], 256, 96, 48))
    # Case 3: multi-tile K with in-kernel K-tail masking + partial edge blocks.
    check(*make_case(ks[2], 640, 32, 64), tm=128, tk=256)   # branch 1
    check(*make_case(ks[3], 640, 64, 32), tm=128, tk=256)   # branch 2

    print("KERNEL_OK")
</pallas_src>

<mosaic_0001>
module attributes {stable_mosaic.version = 11 : i64} {
  func.func @kernel(%arg0: i32, %arg1: i32, %arg2: memref<192x384xf32, #tpu.memory_space<vmem>>, %arg3: memref<384x128xbf16, #tpu.memory_space<vmem>>, %arg4: memref<128x128xbf16, #tpu.memory_space<vmem>>, %arg5: memref<1x128xf32, #tpu.memory_space<vmem>>, %arg6: memref<192x128xf32, #tpu.memory_space<vmem>>, %arg7: memref<192x128xf32, #tpu.memory_space<vmem>>) attributes {dimension_semantics = [#tpu.dimension_semantics<parallel>, #tpu.dimension_semantics<arbitrary>], iteration_bounds = array<i64: 2, 1>, scalar_prefetch = 0 : i64, scratch_operands = 1 : i64, tpu.core_type = #tpu.core_type<tc>, window_params = [{transform_indices = @transform_0, window_bounds = array<i64: 192, 384>}, {pipeline_mode = #tpu.pipeline_mode<synchronous>, transform_indices = @transform_1, window_bounds = array<i64: 384, 128>}, {pipeline_mode = #tpu.pipeline_mode<synchronous>, transform_indices = @transform_2, window_bounds = array<i64: 128, 128>}, {pipeline_mode = #tpu.pipeline_mode<synchronous>, transform_indices = @transform_3, window_bounds = array<i64: 1, 128>}, {transform_indices = @transform_4, window_bounds = array<i64: 192, 128>}]} {
    %c0_i32 = arith.constant 0 : i32
    %0 = arith.cmpi eq, %arg1, %c0_i32 : i32
    %1 = arith.extui %0 : i1 to i32
    %c0_i32_0 = arith.constant 0 : i32
    %2 = arith.cmpi ne, %1, %c0_i32_0 : i32
    scf.if %2 {
      %cst_10 = arith.constant 0.000000e+00 : f32
      %13 = vector.broadcast %cst_10 : f32 to vector<192x128xf32>
      %c0_11 = arith.constant 0 : index
      %c0_12 = arith.constant 0 : index
      %14 = vector.load %arg7[%c0_11, %c0_12] : memref<192x128xf32, #tpu.memory_space<vmem>>, vector<192x128xf32>
      tpu.vector_store %arg7[%c0_11, %c0_12], %13 {strides = array<i32>} : memref<192x128xf32, #tpu.memory_space<vmem>>, vector<192x128xf32>,
    } else {
    }
    %c0 = arith.constant 0 : index
    %c0_1 = arith.constant 0 : index
    %3 = vector.load %arg7[%c0, %c0_1] : memref<192x128xf32, #tpu.memory_space<vmem>>, vector<192x128xf32>
    %c0_2 = arith.constant 0 : index
    %c0_3 = arith.constant 0 : index
    %4 = vector.load %arg2[%c0_2, %c0_3] : memref<192x384xf32, #tpu.memory_space<vmem>>, vector<192x384xf32>
    %5 = arith.truncf %4 : vector<192x384xf32> to vector<192x384xbf16>
    %c0_4 = arith.constant 0 : index
    %c0_5 = arith.constant 0 : index
    %6 = vector.load %arg3[%c0_4, %c0_5] : memref<384x128xbf16, #tpu.memory_space<vmem>>, vector<384x128xbf16>
    %cst = arith.constant dense<0.000000e+00> : vector<192x128xf32>
    %7 = tpu.matmul %5, %6, %cst {dimension_numbers = #tpu.dot_dimension_numbers<[1], [0], [0], [1], [0, 0, 1, 1], [], []>} : vector<192x384xbf16>, vector<384x128xbf16>, vector<192x128xf32> -> vector<192x128xf32>
    %8 = arith.addf %3, %7 : vector<192x128xf32>
    %c0_6 = arith.constant 0 : index
    %c0_7 = arith.constant 0 : index
    %9 = vector.load %arg7[%c0_6, %c0_7] : memref<192x128xf32, #tpu.memory_space<vmem>>, vector<192x128xf32>
    tpu.vector_store %arg7[%c0_6, %c0_7], %8 {strides = array<i32>} : memref<192x128xf32, #tpu.memory_space<vmem>>, vector<192x128xf32>,
    %c0_i32_8 = arith.constant 0 : i32
    %10 = arith.cmpi eq, %arg1, %c0_i32_8 : i32
    %11 = arith.extui %10 : i1 to i32
    %c0_i32_9 = arith.constant 0 : i32
    %12 = arith.cmpi ne, %11, %c0_i32_9 : i32
    scf.if %12 {
      %c0_10 = arith.constant 0 : index
      %c0_11 = arith.constant 0 : index
      %13 = vector.load %arg7[%c0_10, %c0_11] : memref<192x128xf32, #tpu.memory_space<vmem>>, vector<192x128xf32>
      %14 = arith.truncf %13 : vector<192x128xf32> to vector<192x128xbf16>
      %c0_12 = arith.constant 0 : index
      %c0_13 = arith.constant 0 : index
      %15 = vector.load %arg4[%c0_12, %c0_13] : memref<128x128xbf16, #tpu.memory_space<vmem>>, vector<128x128xbf16>
      %cst_14 = arith.constant dense<0.000000e+00> : vector<192x128xf32>
      %16 = tpu.matmul %14, %15, %cst_14 {dimension_numbers = #tpu.dot_dimension_numbers<[1], [0], [0], [1], [0, 0, 1, 1], [], []>} : vector<192x128xbf16>, vector<128x128xbf16>, vector<192x128xf32> -> vector<192x128xf32>
      %c0_15 = arith.constant 0 : index
      %c0_16 = arith.constant 0 : index
      %17 = vector.load %arg5[%c0_15, %c0_16] : memref<1x128xf32, #tpu.memory_space<vmem>>, vector<1x128xf32>
      %18 = vector.broadcast %17 : vector<1x128xf32> to vector<192x128xf32>
      %19 = arith.addf %16, %18 : vector<192x128xf32>
      %c0_17 = arith.constant 0 : index
      %c0_18 = arith.constant 0 : index
      %20 = vector.load %arg6[%c0_17, %c0_18] : memref<192x128xf32, #tpu.memory_space<vmem>>, vector<192x128xf32>
      tpu.vector_store %arg6[%c0_17, %c0_18], %19 {strides = array<i32>} : memref<192x128xf32, #tpu.memory_space<vmem>>, vector<192x128xf32>,
    } else {
    }
    return
  }
  func.func @transform_0(%arg0: i32, %arg1: i32) -> (i32, i32) {
    %c0_i32 = arith.constant 0 : i32
    return %arg0, %arg1 : i32, i32
  }
  func.func @transform_1(%arg0: i32, %arg1: i32) -> (i32, i32) {
    %c0_i32 = arith.constant 0 : i32
    %c0_i32_0 = arith.constant 0 : i32
    %c0_i32_1 = arith.constant 0 : i32
    return %c0_i32, %c0_i32_0 : i32, i32
  }
  func.func @transform_2(%arg0: i32, %arg1: i32) -> (i32, i32) {
    %c0_i32 = arith.constant 0 : i32
    %c0_i32_0 = arith.constant 0 : i32
    %c0_i32_1 = arith.constant 0 : i32
    return %c0_i32, %c0_i32_0 : i32, i32
  }
  func.func @transform_3(%arg0: i32, %arg1: i32) -> (i32, i32) {
    %c0_i32 = arith.constant 0 : i32
    %c0_i32_0 = arith.constant 0 : i32
    %c0_i32_1 = arith.constant 0 : i32
    return %c0_i32, %c0_i32_0 : i32, i32
  }
  func.func @transform_4(%arg0: i32, %arg1: i32) -> (i32, i32) {
    %c0_i32 = arith.constant 0 : i32
    %c0_i32_0 = arith.constant 0 : i32
    return %arg0, %c0_i32 : i32, i32
  }
}

</mosaic_0001>

<llo_original>
// kernel: tpu_custom_call.1
$region0: #{tpu_custom_call.1}
  #allocation0 [shape = 'u32[]', space=smem, size = 0x4, offset = 0x4, fixed_abs, tag = 'smem constant byte address 0x4 - core index']
  #allocation1 [shape = 'u32[144,128]{1,0:T(1,128)}', space=vmem, size = 0x12000, scoped, tag = 'internal scratch']
  #allocation2 [shape = 'f32[192,128]{1,0:T(8,128)}', space=vmem, size = 0x18000, scoped, tag = 'scratch operand']
  %s0 = inlined_call_operand.hbm [shape: f32[384,384], index: 0, kind: input, shape index: {}]
  %s1 = inlined_call_operand.hbm [shape: bf16[384,128], index: 1, kind: input, shape index: {}]
  %s2 = inlined_call_operand.hbm [shape: bf16[128,128], index: 2, kind: input, shape index: {}]
  %s3 = inlined_call_operand.vmem [shape: f32[1,128], index: 3, kind: input, shape index: {}]
  %s4 = inlined_call_operand.hbm [shape: f32[384,128], index: 4, kind: output, shape index: {}]
  %s5 = sld [smem:[#allocation0]]
  $region69: #{tpu_custom_call.1} parent=0
    _
  %s7 = ssub.s32 1, %s5
  %s8 = scalar_select 0, %s7, %s5
  $region1: #{tpu_custom_call.1} parent=0
    #allocation3 [shape = 'u8[589824]{0}', space=vmem, size = 0x90000, scoped, tag = 'input window, operand 0']
    #allocation4 [shape = 's32[2]{0}', space=sflag, size = 0x8, scoped, tag = 'scoped memory for tpu_custom_call.1']
    #allocation5 [shape = 's32[2]{0}', space=sflag, size = 0x8, scoped, tag = 'scoped memory for tpu_custom_call.1']
    #allocation6 [shape = 'u8[98304]{0}', space=vmem, size = 0x18000, scoped, tag = 'input window, operand 1, single buffered']
    #allocation7 [shape = 's32[1]{0}', space=sflag, size = 0x4, scoped, tag = 'scoped memory for tpu_custom_call.1']
    #allocation8 [shape = 'u8[32768]{0}', space=vmem, size = 0x8000, scoped, tag = 'input window, operand 2, single buffered']
    #allocation9 [shape = 'u8[196608]{0}', space=vmem, size = 0x30000, scoped, tag = 'output window, operand 0']
    %9 = vsyncpa [#allocation4], 0
    %s10 = scalar_lea.sflag [#allocation4], 1
    %11 = vsyncpa %s10, 0
    %12 = vsyncpa [#allocation7], 0
    %13 = vsyncpa [#allocation5], 0
    %s14 = scalar_lea.sflag [#allocation5], 1
    %15 = vsyncpa %s14, 0
    loop: start=0, step=1, limit=4
    $region2: #{tpu_custom_call.1} parent=1 // loop_pre_header
      _
    $region3: #{tpu_custom_call.1} parent=1 // loop_header
      %s17 = sphi 0, %s21
      %p18 = scmp.ge.s32.totalorder %s17, 4
      %s24 = sphi 0, %s36
      %s25 = sphi 0, %s32
      %s26 = sphi 0, %s24
      %s27 = sphi 0, %s25
      %s28 = sphi 0, %s26
      %s29 = sphi 0, %s27
      %s41 = sphi 0, %s43
      %s44 = sphi 0, %s41
      %s45 = sphi 0, %s44
      %s61 = sphi 0, %s45
      %s65 = sphi 0, %s65
      %s67 = sphi 0, %s65
      %s68 = sphi 0, %s67
      %s82 = sphi 0, %s68
      %s86 = sphi 0, %s86
      %s88 = sphi 0, %s86
      %s89 = sphi 0, %s88
      %s103 = sphi 0, %s89
      %s107 = sphi 0, %s107
      %s109 = sphi 0, %s107
      %s110 = sphi 0, %s109
      %s124 = sphi 0, %s110
      %s130 = sphi 0, %s132
      %s133 = sphi 0, %s130
      %s134 = sphi 0, %s133
      %s150 = sphi 0, %s134
    $region4: #{tpu_custom_call.1} parent=1 // loop_header_branch
      %20 = sbr.rel (%p18) target = $region8
    $region5: #{tpu_custom_call.1} parent=1 // loop_body
      %s22 = ssub.s32 %s17, 1
      %s23 = ssub.s32 %s17, 2
      %s30 = sadd.s32 1, %s25
      %p31 = scmp.ge.s32.totalorder %s30, 1
      %s32 = scalar_select %p31, 0, %s30
      %s33 = sadd.s32 1, %s24
      %s34 = scalar_select %p31, %s33, %s24
      %p35 = scmp.ge.s32.totalorder %s34, 2
      %s36 = scalar_select %p35, 0, %s34
      %s37 = ssub.s32 %s24, %s36
      %s38 = ssub.s32 %s25, %s32
      %s39 = sor.u32 %s37, %s38
      %p40 = scmp.eq.s32.totalorder %s39, 0
      %s42 = sadd.s32 %s41, 1
      %s43 = scalar_select %p40, %s41, %s42
      %p46 = pneg %p40
      %p47 = scmp.eq.s32.totalorder %s17, 1
      %p48 = por %p46, %p47
      %p49 = scmp.ne.s32.totalorder %s41, %s44
      %p50 = scmp.eq.s32.totalorder %s17, 0
      %p51 = por %p49, %p50
      %p52 = scmp.ne.s32.totalorder %s41, %s44
      %p53 = scmp.eq.s32.totalorder %s22, 1
      %p54 = por %p52, %p53
      %p55 = scmp.ne.s32.totalorder %s44, %s45
      %p56 = scmp.eq.s32.totalorder %s22, 0
      %p57 = por %p55, %p56
      %p58 = scmp.ne.s32.totalorder %s44, %s45
      %p59 = scmp.eq.s32.totalorder %s23, 1
      %p60 = por %p58, %p59
      %p62 = scmp.ne.s32.totalorder %s45, %s61
      %p63 = scmp.eq.s32.totalorder %s23, 0
      %p64 = por %p62, %p63
      %s66 = sadd.s32 %s65, 1
      %p69 = scmp.eq.s32.totalorder %s17, 1
      %p70 = scmp.ne.s32.totalorder %s65, %s67
      %p71 = scmp.eq.s32.totalorder %s17, 0
      %p72 = por %p70, %p71
      %p73 = scmp.ne.s32.totalorder %s65, %s67
      %p74 = scmp.eq.s32.totalorder %s22, 1
      %p75 = por %p73, %p74
      %p76 = scmp.ne.s32.totalorder %s67, %s68
      %p77 = scmp.eq.s32.totalorder %s22, 0
      %p78 = por %p76, %p77
      %p79 = scmp.ne.s32.totalorder %s67, %s68
      %p80 = scmp.eq.s32.totalorder %s23, 1
      %p81 = por %p79, %p80
      %p83 = scmp.ne.s32.totalorder %s68, %s82
      %p84 = scmp.eq.s32.totalorder %s23, 0
      %p85 = por %p83, %p84
      %s87 = sadd.s32 %s86, 1
      %p90 = scmp.eq.s32.totalorder %s17, 1
      %p91 = scmp.ne.s32.totalorder %s86, %s88
      %p92 = scmp.eq.s32.totalorder %s17, 0
      %p93 = por %p91, %p92
      %p94 = scmp.ne.s32.totalorder %s86, %s88
      %p95 = scmp.eq.s32.totalorder %s22, 1
      %p96 = por %p94, %p95
      %p97 = scmp.ne.s32.totalorder %s88, %s89
      %p98 = scmp.eq.s32.totalorder %s22, 0
      %p99 = por %p97, %p98
      %p100 = scmp.ne.s32.totalorder %s88, %s89
      %p101 = scmp.eq.s32.totalorder %s23, 1
      %p102 = por %p100, %p101
      %p104 = scmp.ne.s32.totalorder %s89, %s103
      %p105 = scmp.eq.s32.totalorder %s23, 0
      %p106 = por %p104, %p105
      %s108 = sadd.s32 %s107, 1
      %p111 = scmp.eq.s32.totalorder %s17, 1
      %p112 = scmp.ne.s32.totalorder %s107, %s109
      %p113 = scmp.eq.s32.totalorder %s17, 0
      %p114 = por %p112, %p113
      %p115 = scmp.ne.s32.totalorder %s107, %s109
      %p116 = scmp.eq.s32.totalorder %s22, 1
      %p117 = por %p115, %p116
      %p118 = scmp.ne.s32.totalorder %s109, %s110
      %p119 = scmp.eq.s32.totalorder %s22, 0
      %p120 = por %p118, %p119
      %p121 = scmp.ne.s32.totalorder %s109, %s110
      %p122 = scmp.eq.s32.totalorder %s23, 1
      %p123 = por %p121, %p122
      %p125 = scmp.ne.s32.totalorder %s110, %s124
      %p126 = scmp.eq.s32.totalorder %s23, 0
      %p127 = por %p125, %p126
      %s128 = ssub.s32 %s24, %s36
      %p129 = scmp.eq.s32.totalorder %s128, 0
      %s131 = sadd.s32 %s130, 1
      %s132 = scalar_select %p129, %s130, %s131
      %p135 = pneg %p129
      %p136 = scmp.eq.s32.totalorder %s17, 1
      %p137 = por %p135, %p136
      %p138 = scmp.ne.s32.totalorder %s130, %s133
      %p139 = scmp.eq.s32.totalorder %s17, 0
      %p140 = por %p138, %p139
      %p141 = scmp.ne.s32.totalorder %s130, %s133
      %p142 = scmp.eq.s32.totalorder %s22, 1
      %p143 = por %p141, %p142
      %p144 = scmp.ne.s32.totalorder %s133, %s134
      %p145 = scmp.eq.s32.totalorder %s22, 0
      %p146 = por %p144, %p145
      %p147 = scmp.ne.s32.totalorder %s133, %s134
      %p148 = scmp.eq.s32.totalorder %s23, 1
      %p149 = por %p147, %p148
      %p151 = scmp.ne.s32.totalorder %s134, %s150
      %p152 = scmp.eq.s32.totalorder %s23, 0
      %p153 = por %p151, %p152
      %p154 = scmp.le.s32.totalorder 1, %s17
      %p155 = scmp.lt.s32.totalorder %s17, 3
      %p156 = pnand %p154, %p155
      %p157 = pneg %p156
      // Predicated region
      $region9: #{tpu_custom_call.1} parent=5 // pred_check
        _
      $region10: #{tpu_custom_call.1} parent=5 // pred_check_branch
        %159 = sbr.rel (%p156) target = $region12
      $region11: #{tpu_custom_call.1} parent=5 // pred_region
        %s160 = ssub.s32 %s17, 1
        // Predicated region
        $region13: #{tpu_custom_call.1} parent=11 // pred_check
          %p161 = pneg %p78
        $region14: #{tpu_custom_call.1} parent=11 // pred_check_branch
          %163 = sbr.rel (%p161) target = $region16
        $region15: #{tpu_custom_call.1} parent=11 // pred_region
          %s165 = ssub.s32 3072, 3072
          %166 = vsyncadd [#allocation7], %s165
          %s167 = sshll.u32 [#allocation6], 4
          %s168 = int_to_ptr.vmem [resolvable:$true] %s167
          %173 = dma.hbm_to_vmem [thread:$0]  %s1, 3072, %s168, [#allocation7], 64, 64, 4
        $region16: #{tpu_custom_call.1} parent=11 // pred_fallthru
          _
        // Predicated region
        $region17: #{tpu_custom_call.1} parent=11 // pred_check
          %p174 = pneg %p99
        $region18: #{tpu_custom_call.1} parent=11 // pred_check_branch
          %176 = sbr.rel (%p174) target = $region20
        $region19: #{tpu_custom_call.1} parent=11 // pred_region
          %s178 = ssub.s32 1024, 1024
          %179 = vsyncadd [#allocation7], %s178
          %s180 = sshll.u32 [#allocation8], 4
          %s181 = int_to_ptr.vmem [resolvable:$true] %s180
          %186 = dma.hbm_to_vmem [thread:$0]  %s2, 1024, %s181, [#allocation7], 64, 64, 4
        $region20: #{tpu_custom_call.1} parent=11 // pred_fallthru
          _
        // Predicated region
        $region21: #{tpu_custom_call.1} parent=11 // pred_check
          %p187 = pneg %p120
        $region22: #{tpu_custom_call.1} parent=11 // pred_check_branch
          %189 = sbr.rel (%p187) target = $region24
        $region23: #{tpu_custom_call.1} parent=11 // pred_region
          _
        $region24: #{tpu_custom_call.1} parent=11 // pred_fallthru
          _
      $region12: #{tpu_custom_call.1} parent=5 // pred_fallthru
        _
      %p190 = scmp.lt.s32.totalorder %s17, 2
      // Predicated region
      $region25: #{tpu_custom_call.1} parent=5 // pred_check
        %p191 = pneg %p190
      $region26: #{tpu_custom_call.1} parent=5 // pred_check_branch
        %193 = sbr.rel (%p191) target = $region28
      $region27: #{tpu_custom_call.1} parent=5 // pred_region
        // Predicated region
        $region29: #{tpu_custom_call.1} parent=27 // pred_check
          %p194 = pneg %p51
        $region30: #{tpu_custom_call.1} parent=27 // pred_check_branch
          %196 = sbr.rel (%p194) target = $region32
        $region31: #{tpu_custom_call.1} parent=27 // pred_region
          %s197 = sand.u32 %s41, 1
          %s198 = scalar_lea.sflag [#allocation4], %s197
          %s199 = sand.u32 %s41, 1
          %s200 = smul.addr %s199, 576
          %s201 = scalar_lea.vmem [#allocation3], %s200
          %s202 = smul.u32 24, %s24
          %s203 = smul.u32 3, %s25
          %s205 = ssub.s32 9216, 9216
          %206 = vsyncadd %s198, %s205
          %s207 = smul.addr %s202, 3
          %s208 = sadd.s32 %s203, %s207
          %s209 = smul.addr %s208, 128
          %s210 = scalar_lea.hbm %s0, %s209
          %s211 = sshll.u32 %s201, 4
          %s212 = int_to_ptr.vmem [resolvable:$true] %s211
          %217 = dma.hbm_to_vmem [thread:$0]  %s210, 9216, %s212, %s198, 384, 384, 24
        $region32: #{tpu_custom_call.1} parent=27 // pred_fallthru
          _
      $region28: #{tpu_custom_call.1} parent=5 // pred_fallthru
        _
      %p218 = scmp.le.s32.totalorder 1, %s17
      %p219 = scmp.lt.s32.totalorder %s17, 3
      %p220 = pnand %p218, %p219
      %p221 = pneg %p220
      // Predicated region
      $region33: #{tpu_custom_call.1} parent=5 // pred_check
        _
      $region34: #{tpu_custom_call.1} parent=5 // pred_check_branch
        %223 = sbr.rel (%p220) target = $region36
      $region35: #{tpu_custom_call.1} parent=5 // pred_region
        %s224 = ssub.s32 %s17, 1
        %s225 = sand.u32 %s44, 1
        %s226 = scalar_lea.sflag [#allocation4], %s225
        %s227 = sand.u32 %s44, 1
        %s228 = smul.addr %s227, 576
        %s229 = scalar_lea.vmem [#allocation3], %s228
        // Predicated region
        $region37: #{tpu_custom_call.1} parent=35 // pred_check
          %p230 = pneg %p57
        $region38: #{tpu_custom_call.1} parent=35 // pred_check_branch
          %232 = sbr.rel (%p230) target = $region40
        $region39: #{tpu_custom_call.1} parent=35 // pred_region
          %233 = dma.done %s226, 9216
        $region40: #{tpu_custom_call.1} parent=35 // pred_fallthru
          _
        // Predicated region
        $region41: #{tpu_custom_call.1} parent=35 // pred_check
          %p234 = pneg %p78
        $region42: #{tpu_custom_call.1} parent=35 // pred_check_branch
          %236 = sbr.rel (%p234) target = $region44
        $region43: #{tpu_custom_call.1} parent=35 // pred_region
          %237 = dma.done [#allocation7], 3072
        $region44: #{tpu_custom_call.1} parent=35 // pred_fallthru
          _
        // Predicated region
        $region45: #{tpu_custom_call.1} parent=35 // pred_check
          %p238 = pneg %p99
        $region46: #{tpu_custom_call.1} parent=35 // pred_check_branch
          %240 = sbr.rel (%p238) target = $region48
        $region47: #{tpu_custom_call.1} parent=35 // pred_region
          %241 = dma.done [#allocation7], 1024
        $region48: #{tpu_custom_call.1} parent=35 // pred_fallthru
          _
        %s242 = sand.u32 %s44, 1
        %s243 = scalar_lea.sflag [#allocation4], %s242
        %s244 = sand.u32 %s44, 1
        %s245 = smul.addr %s244, 576
        %s246 = scalar_lea.vmem [#allocation3], %s245
        %p247 = pneg %p57
        %p248 = pneg %p54
        %p249 = pneg %p78
        %p250 = pneg %p75
        %p251 = pneg %p99
        %p252 = pneg %p96
        %p253 = pneg %p120
        %p254 = pneg %p117
        %p255 = pneg %p146
        %p256 = pneg %p143
        %s257 = sand.u32 %s133, 1
        %s258 = scalar_lea.sflag [#allocation5], %s257
        %s259 = sand.u32 %s133, 1
        %s260 = smul.addr %s259, 192
        %s261 = scalar_lea.vmem [#allocation9], %s260
        %s262 = smul.u32 24, %s26
        %s263 = smul.u32 3, %s27
        %s264 = smul.u32 24, %s26
        %p266 = scmp.eq.s32.totalorder %s27, 0
        // Predicated region
        $region49: #{tpu_custom_call.1} parent=35 // pred_check
          %p267 = pneg %p266
        $region50: #{tpu_custom_call.1} parent=35 // pred_check_branch
          %269 = sbr.rel (%p267) target = $region52
        $region51: #{tpu_custom_call.1} parent=35 // pred_region
          %270 = vst [vmem:[#allocation2] sm:$0xff] 0.0
          %271 = vst [vmem:[#allocation2 + $0x8] sm:$0xff] 0.0
          %272 = vst [vmem:[#allocation2 + $0x10] sm:$0xff] 0.0
          %273 = vst [vmem:[#allocation2 + $0x18] sm:$0xff] 0.0
          %274 = vst [vmem:[#allocation2 + $0x20] sm:$0xff] 0.0
          %275 = vst [vmem:[#allocation2 + $0x28] sm:$0xff] 0.0
          %276 = vst [vmem:[#allocation2 + $0x30] sm:$0xff] 0.0
          %277 = vst [vmem:[#allocation2 + $0x38] sm:$0xff] 0.0
          %278 = vst [vmem:[#allocation2 + $0x40] sm:$0xff] 0.0
          %279 = vst [vmem:[#allocation2 + $0x48] sm:$0xff] 0.0
          %280 = vst [vmem:[#allocation2 + $0x50] sm:$0xff] 0.0
          %281 = vst [vmem:[#allocation2 + $0x58] sm:$0xff] 0.0
          %282 = vst [vmem:[#allocation2 + $0x60] sm:$0xff] 0.0
          %283 = vst [vmem:[#allocation2 + $0x68] sm:$0xff] 0.0
          %284 = vst [vmem:[#allocation2 + $0x70] sm:$0xff] 0.0
          %285 = vst [vmem:[#allocation2 + $0x78] sm:$0xff] 0.0
          %286 = vst [vmem:[#allocation2 + $0x80] sm:$0xff] 0.0
          %287 = vst [vmem:[#allocation2 + $0x88] sm:$0xff] 0.0
          %288 = vst [vmem:[#allocation2 + $0x90] sm:$0xff] 0.0
          %289 = vst [vmem:[#allocation2 + $0x98] sm:$0xff] 0.0
          %290 = vst [vmem:[#allocation2 + $0xa0] sm:$0xff] 0.0
          %291 = vst [vmem:[#allocation2 + $0xa8] sm:$0xff] 0.0
          %292 = vst [vmem:[#allocation2 + $0xb0] sm:$0xff] 0.0
          %293 = vst [vmem:[#allocation2 + $0xb8] sm:$0xff] 0.0
        $region52: #{tpu_custom_call.1} parent=35 // pred_fallthru
          _
        %v294 = vld [vmem:[#allocation2] sm:$0xff]
        %v295 = vld [vmem:[#allocation2 + $0x8] sm:$0xff]
        %v296 = vld [vmem:[#allocation2 + $0x10] sm:$0xff]
        %v297 = vld [vmem:[#allocation2 + $0x18] sm:$0xff]
        %v298 = vld [vmem:[#allocation2 + $0x20] sm:$0xff]
        %v299 = vld [vmem:[#allocation2 + $0x28] sm:$0xff]
        %v300 = vld [vmem:[#allocation2 + $0x30] sm:$0xff]
        %v301 = vld [vmem:[#allocation2 + $0x38] sm:$0xff]
        %v302 = vld [vmem:[#allocation2 + $0x40] sm:$0xff]
        %v303 = vld [vmem:[#allocation2 + $0x48] sm:$0xff]
        %v304 = vld [vmem:[#allocation2 + $0x50] sm:$0xff]
        %v305 = vld [vmem:[#allocation2 + $0x58] sm:$0xff]
        %v306 = vld [vmem:[#allocation2 + $0x60] sm:$0xff]
        %v307 = vld [vmem:[#allocation2 + $0x68] sm:$0xff]
        %v308 = vld [vmem:[#allocation2 + $0x70] sm:$0xff]
        %v309 = vld [vmem:[#allocation2 + $0x78] sm:$0xff]
        %v310 = vld [vmem:[#allocation2 + $0x80] sm:$0xff]
        %v311 = vld [vmem:[#allocation2 + $0x88] sm:$0xff]
        %v312 = vld [vmem:[#allocation2 + $0x90] sm:$0xff]
        %v313 = vld [vmem:[#allocation2 + $0x98] sm:$0xff]
        %v314 = vld [vmem:[#allocation2 + $0xa0] sm:$0xff]
        %v315 = vld [vmem:[#allocation2 + $0xa8] sm:$0xff]
        %v316 = vld [vmem:[#allocation2 + $0xb0] sm:$0xff]
        %v317 = vld [vmem:[#allocation2 + $0xb8] sm:$0xff]
        %v318 = vld [vmem:[%s229] sm:$0xff]
        %v319 = vld [vmem:[%s229 + $0x8] sm:$0xff]
        %v320 = vld [vmem:[%s229 + $0x10] sm:$0xff]
        %v321 = vld [vmem:[%s229 + $0x18] sm:$0xff]
        %v322 = vld [vmem:[%s229 + $0x20] sm:$0xff]
        %v323 = vld [vmem:[%s229 + $0x28] sm:$0xff]
        %v324 = vld [vmem:[%s229 + $0x30] sm:$0xff]
        %v325 = vld [vmem:[%s229 + $0x38] sm:$0xff]
        %v326 = vld [vmem:[%s229 + $0x40] sm:$0xff]
        %v327 = vld [vmem:[%s229 + $0x48] sm:$0xff]
        %v328 = vld [vmem:[%s229 + $0x50] sm:$0xff]
        %v329 = vld [vmem:[%s229 + $0x58] sm:$0xff]
        %v330 = vld [vmem:[%s229 + $0x60] sm:$0xff]
        %v331 = vld [vmem:[%s229 + $0x68] sm:$0xff]
        %v332 = vld [vmem:[%s229 + $0x70] sm:$0xff]
        %v333 = vld [vmem:[%s229 + $0x78] sm:$0xff]
        %v334 = vld [vmem:[%s229 + $0x80] sm:$0xff]
        %v335 = vld [vmem:[%s229 + $0x88] sm:$0xff]
        %v336 = vld [vmem:[%s229 + $0x90] sm:$0xff]
        %v337 = vld [vmem:[%s229 + $0x98] sm:$0xff]
        %v338 = vld [vmem:[%s229 + $0xa0] sm:$0xff]
        %v339 = vld [vmem:[%s229 + $0xa8] sm:$0xff]
        %v340 = vld [vmem:[%s229 + $0xb0] sm:$0xff]
        %v341 = vld [vmem:[%s229 + $0xb8] sm:$0xff]
        %v342 = vld [vmem:[%s229 + $0xc0] sm:$0xff]
        %v343 = vld [vmem:[%s229 + $0xc8] sm:$0xff]
        %v344 = vld [vmem:[%s229 + $0xd0] sm:$0xff]
        %v345 = vld [vmem:[%s229 + $0xd8] sm:$0xff]
        %v346 = vld [vmem:[%s229 + $0xe0] sm:$0xff]
        %v347 = vld [vmem:[%s229 + $0xe8] sm:$0xff]
        %v348 = vld [vmem:[%s229 + $0xf0] sm:$0xff]
        %v349 = vld [vmem:[%s229 + $0xf8] sm:$0xff]
        %v350 = vld [vmem:[%s229 + $0x100] sm:$0xff]
        %v351 = vld [vmem:[%s229 + $0x108] sm:$0xff]
        %v352 = vld [vmem:[%s229 + $0x110] sm:$0xff]
        %v353 = vld [vmem:[%s229 + $0x118] sm:$0xff]
        %v354 = vld [vmem:[%s229 + $0x120] sm:$0xff]
        %v355 = vld [vmem:[%s229 + $0x128] sm:$0xff]
        %v356 = vld [vmem:[%s229 + $0x130] sm:$0xff]
        %v357 = vld [vmem:[%s229 + $0x138] sm:$0xff]
        %v358 = vld [vmem:[%s229 + $0x140] sm:$0xff]
        %v359 = vld [vmem:[%s229 + $0x148] sm:$0xff]
        %v360 = vld [vmem:[%s229 + $0x150] sm:$0xff]
        %v361 = vld [vmem:[%s229 + $0x158] sm:$0xff]
        %v362 = vld [vmem:[%s229 + $0x160] sm:$0xff]
        %v363 = vld [vmem:[%s229 + $0x168] sm:$0xff]
        %v364 = vld [vmem:[%s229 + $0x170] sm:$0xff]
        %v365 = vld [vmem:[%s229 + $0x178] sm:$0xff]
        %v366 = vld [vmem:[%s229 + $0x180] sm:$0xff]
        %v367 = vld [vmem:[%s229 + $0x188] sm:$0xff]
        %v368 = vld [vmem:[%s229 + $0x190] sm:$0xff]
        %v369 = vld [vmem:[%s229 + $0x198] sm:$0xff]
        %v370 = vld [vmem:[%s229 + $0x1a0] sm:$0xff]
        %v371 = vld [vmem:[%s229 + $0x1a8] sm:$0xff]
        %v372 = vld [vmem:[%s229 + $0x1b0] sm:$0xff]
        %v373 = vld [vmem:[%s229 + $0x1b8] sm:$0xff]
        %v374 = vld [vmem:[%s229 + $0x1c0] sm:$0xff]
        %v375 = vld [vmem:[%s229 + $0x1c8] sm:$0xff]
        %v376 = vld [vmem:[%s229 + $0x1d0] sm:$0xff]
        %v377 = vld [vmem:[%s229 + $0x1d8] sm:$0xff]
        %v378 = vld [vmem:[%s229 + $0x1e0] sm:$0xff]
        %v379 = vld [vmem:[%s229 + $0x1e8] sm:$0xff]
        %v380 = vld [vmem:[%s229 + $0x1f0] sm:$0xff]
        %v381 = vld [vmem:[%s229 + $0x1f8] sm:$0xff]
        %v382 = vld [vmem:[%s229 + $0x200] sm:$0xff]
        %v383 = vld [vmem:[%s229 + $0x208] sm:$0xff]
        %v384 = vld [vmem:[%s229 + $0x210] sm:$0xff]
        %v385 = vld [vmem:[%s229 + $0x218] sm:$0xff]
        %v386 = vld [vmem:[%s229 + $0x220] sm:$0xff]
        %v387 = vld [vmem:[%s229 + $0x228] sm:$0xff]
        %v388 = vld [vmem:[%s229 + $0x230] sm:$0xff]
        %v389 = vld [vmem:[%s229 + $0x238] sm:$0xff]
        %v390 = vpack.c.bf16 %v321, %v318
        %v391 = vpack.c.bf16 %v322, %v319
        %v392 = vpack.c.bf16 %v323, %v320
        %v393 = vpack.c.bf16 %v327, %v324
        %v394 = vpack.c.bf16 %v328, %v325
        %v395 = vpack.c.bf16 %v329, %v326
        %v396 = vpack.c.bf16 %v333, %v330
        %v397 = vpack.c.bf16 %v334, %v331
        %v398 = vpack.c.bf16 %v335, %v332
        %v399 = vpack.c.bf16 %v339, %v336
        %v400 = vpack.c.bf16 %v340, %v337
        %v401 = vpack.c.bf16 %v341, %v338
        %v402 = vpack.c.bf16 %v345, %v342
        %v403 = vpack.c.bf16 %v346, %v343
        %v404 = vpack.c.bf16 %v347, %v344
        %v405 = vpack.c.bf16 %v351, %v348
        %v406 = vpack.c.bf16 %v352, %v349
        %v407 = vpack.c.bf16 %v353, %v350
        %v408 = vpack.c.bf16 %v357, %v354
        %v409 = vpack.c.bf16 %v358, %v355
        %v410 = vpack.c.bf16 %v359, %v356
        %v411 = vpack.c.bf16 %v363, %v360
        %v412 = vpack.c.bf16 %v364, %v361
        %v413 = vpack.c.bf16 %v365, %v362
        %v414 = vpack.c.bf16 %v369, %v366
        %v415 = vpack.c.bf16 %v370, %v367
        %v416 = vpack.c.bf16 %v371, %v368
        %v417 = vpack.c.bf16 %v375, %v372
        %v418 = vpack.c.bf16 %v376, %v373
        %v419 = vpack.c.bf16 %v377, %v374
        %v420 = vpack.c.bf16 %v381, %v378
        %v421 = vpack.c.bf16 %v382, %v379
        %v422 = vpack.c.bf16 %v383, %v380
        %v423 = vpack.c.bf16 %v387, %v384
        %v424 = vpack.c.bf16 %v388, %v385
        %v425 = vpack.c.bf16 %v389, %v386
        %v426 = vld [vmem:[#allocation6] sm:$0xf]
        %v427 = vld [vmem:[#allocation6 + $0x4] sm:$0xf]
        %v428 = vld [vmem:[#allocation6 + $0x8] sm:$0xf]
        %v429 = vld [vmem:[#allocation6 + $0xc] sm:$0xf]
        %v430 = vld [vmem:[#allocation6 + $0x10] sm:$0xf]
        %v431 = vld [vmem:[#allocation6 + $0x14] sm:$0xf]
        %v432 = vld [vmem:[#allocation6 + $0x18] sm:$0xf]
        %v433 = vld [vmem:[#allocation6 + $0x1c] sm:$0xf]
        %v434 = vld [vmem:[#allocation6 + $0x20] sm:$0xf]
        %v435 = vld [vmem:[#allocation6 + $0x24] sm:$0xf]
        %v436 = vld [vmem:[#allocation6 + $0x28] sm:$0xf]
        %v437 = vld [vmem:[#allocation6 + $0x2c] sm:$0xf]
        %v438 = vld [vmem:[#allocation6 + $0x30] sm:$0xf]
        %v439 = vld [vmem:[#allocation6 + $0x34] sm:$0xf]
        %v440 = vld [vmem:[#allocation6 + $0x38] sm:$0xf]
        %v441 = vld [vmem:[#allocation6 + $0x3c] sm:$0xf]
        %v442 = vld [vmem:[#allocation6 + $0x40] sm:$0xf]
        %v443 = vld [vmem:[#allocation6 + $0x44] sm:$0xf]
        %v444 = vld [vmem:[#allocation6 + $0x48] sm:$0xf]
        %v445 = vld [vmem:[#allocation6 + $0x4c] sm:$0xf]
        %v446 = vld [vmem:[#allocation6 + $0x50] sm:$0xf]
        %v447 = vld [vmem:[#allocation6 + $0x54] sm:$0xf]
        %v448 = vld [vmem:[#allocation6 + $0x58] sm:$0xf]
        %v449 = vld [vmem:[#allocation6 + $0x5c] sm:$0xf]
        %v450 = vld [vmem:[#allocation6 + $0x60] sm:$0xf]
        %v451 = vld [vmem:[#allocation6 + $0x64] sm:$0xf]
        %v452 = vld [vmem:[#allocation6 + $0x68] sm:$0xf]
        %v453 = vld [vmem:[#allocation6 + $0x6c] sm:$0xf]
        %v454 = vld [vmem:[#allocation6 + $0x70] sm:$0xf]
        %v455 = vld [vmem:[#allocation6 + $0x74] sm:$0xf]
        %v456 = vld [vmem:[#allocation6 + $0x78] sm:$0xf]
        %v457 = vld [vmem:[#allocation6 + $0x7c] sm:$0xf]
        %v458 = vld [vmem:[#allocation6 + $0x80] sm:$0xf]
        %v459 = vld [vmem:[#allocation6 + $0x84] sm:$0xf]
        %v460 = vld [vmem:[#allocation6 + $0x88] sm:$0xf]
        %v461 = vld [vmem:[#allocation6 + $0x8c] sm:$0xf]
        %v462 = vld [vmem:[#allocation6 + $0x90] sm:$0xf]
        %v463 = vld [vmem:[#allocation6 + $0x94] sm:$0xf]
        %v464 = vld [vmem:[#allocation6 + $0x98] sm:$0xf]
        %v465 = vld [vmem:[#allocation6 + $0x9c] sm:$0xf]
        %v466 = vld [vmem:[#allocation6 + $0xa0] sm:$0xf]
        %v467 = vld [vmem:[#allocation6 + $0xa4] sm:$0xf]
        %v468 = vld [vmem:[#allocation6 + $0xa8] sm:$0xf]
        %v469 = vld [vmem:[#allocation6 + $0xac] sm:$0xf]
        %v470 = vld [vmem:[#allocation6 + $0xb0] sm:$0xf]
        %v471 = vld [vmem:[#allocation6 + $0xb4] sm:$0xf]
        %v472 = vld [vmem:[#allocation6 + $0xb8] sm:$0xf]
        %v473 = vld [vmem:[#allocation6 + $0xbc] sm:$0xf]
        %v522 = vunpack.c.l.b16 %v426
        %v523 = vunpack.c.l.b16 %v427
        %v524 = vunpack.c.l.b16 %v428
        %v525 = vunpack.c.l.b16 %v429
        %v526 = vunpack.c.l.b16 %v430
        %v527 = vunpack.c.l.b16 %v431
        %v528 = vunpack.c.l.b16 %v432
        %v529 = vunpack.c.l.b16 %v433
        %v530 = vunpack.c.l.b16 %v434
        %v531 = vunpack.c.l.b16 %v435
        %v532 = vunpack.c.l.b16 %v436
        %v533 = vunpack.c.l.b16 %v437
        %v534 = vunpack.c.l.b16 %v438
        %v535 = vunpack.c.l.b16 %v439
        %v536 = vunpack.c.l.b16 %v440
        %v537 = vunpack.c.l.b16 %v441
        %v538 = vunpack.c.l.b16 %v442
        %v539 = vunpack.c.l.b16 %v443
        %v540 = vunpack.c.l.b16 %v444
        %v541 = vunpack.c.l.b16 %v445
        %v542 = vunpack.c.l.b16 %v446
        %v543 = vunpack.c.l.b16 %v447
        %v544 = vunpack.c.l.b16 %v448
        %v545 = vunpack.c.l.b16 %v449
        %v546 = vunpack.c.l.b16 %v450
        %v547 = vunpack.c.l.b16 %v451
        %v548 = vunpack.c.l.b16 %v452
        %v549 = vunpack.c.l.b16 %v453
        %v550 = vunpack.c.l.b16 %v454
        %v551 = vunpack.c.l.b16 %v455
        %v552 = vunpack.c.l.b16 %v456
        %v553 = vunpack.c.l.b16 %v457
        %v554 = vunpack.c.l.b16 %v458
        %v555 = vunpack.c.l.b16 %v459
        %v556 = vunpack.c.l.b16 %v460
        %v557 = vunpack.c.l.b16 %v461
        %v558 = vunpack.c.l.b16 %v462
        %v559 = vunpack.c.l.b16 %v463
        %v560 = vunpack.c.l.b16 %v464
        %v561 = vunpack.c.l.b16 %v465
        %v562 = vunpack.c.l.b16 %v466
        %v563 = vunpack.c.l.b16 %v467
        %v564 = vunpack.c.l.b16 %v468
        %v565 = vunpack.c.l.b16 %v469
        %v566 = vunpack.c.l.b16 %v470
        %v567 = vunpack.c.l.b16 %v471
        %v568 = vunpack.c.l.b16 %v472
        %v569 = vunpack.c.l.b16 %v473
        %v570 = vpack.c.b16 %v523, %v522
        %v571 = vpack.c.b16 %v525, %v524
        %v572 = vpack.c.b16 %v527, %v526
        %v573 = vpack.c.b16 %v529, %v528
        %v574 = vpack.c.b16 %v531, %v530
        %v575 = vpack.c.b16 %v533, %v532
        %v576 = vpack.c.b16 %v535, %v534
        %v577 = vpack.c.b16 %v537, %v536
        %v578 = vpack.c.b16 %v539, %v538
        %v579 = vpack.c.b16 %v541, %v540
        %v580 = vpack.c.b16 %v543, %v542
        %v581 = vpack.c.b16 %v545, %v544
        %v582 = vpack.c.b16 %v547, %v546
        %v583 = vpack.c.b16 %v549, %v548
        %v584 = vpack.c.b16 %v551, %v550
        %v585 = vpack.c.b16 %v553, %v552
        %v586 = vpack.c.b16 %v555, %v554
        %v587 = vpack.c.b16 %v557, %v556
        %v588 = vpack.c.b16 %v559, %v558
        %v589 = vpack.c.b16 %v561, %v560
        %v590 = vpack.c.b16 %v563, %v562
        %v591 = vpack.c.b16 %v565, %v564
        %v592 = vpack.c.b16 %v567, %v566
        %v593 = vpack.c.b16 %v569, %v568
        %618 = vmatprep.subr.bf16.mxu0 0
        %619 = vmatpush1.bf16.msra.mxu0 %v570
        %620 = vmatprep.subr.bf16.mxu0 0
        %621 = vmatpush1.bf16.msra.mxu0 %v571
        %622 = vmatprep.subr.bf16.mxu0 0
        %623 = vmatpush1.bf16.msra.mxu0 %v572
        %624 = vmatprep.subr.bf16.mxu0 0
        %625 = vmatpush1.bf16.msra.mxu0 %v573
        %626 = vmatprep.subr.bf16.mxu0 0
        %627 = vmatpush1.bf16.msra.mxu0 %v574
        %628 = vmatprep.subr.bf16.mxu0 0
        %629 = vmatpush1.bf16.msra.mxu0 %v575
        %630 = vmatprep.subr.bf16.mxu0 0
        %631 = vmatpush1.bf16.msra.mxu0 %v576
        %632 = vmatprep.subr.bf16.mxu0 0
        %633 = vmatpush1.bf16.msra.mxu0 %v577
        %634 = vmatprep.subr.bf16.mxu0 0
        %635 = vmatpush1.bf16.msra.mxu0 %v578
        %636 = vmatprep.subr.bf16.mxu0 0
        %637 = vmatpush1.bf16.msra.mxu0 %v579
        %638 = vmatprep.subr.bf16.mxu0 0
        %639 = vmatpush1.bf16.msra.mxu0 %v580
        %640 = vmatprep.subr.bf16.mxu0 0
        %641 = vmatpush1.bf16.msra.mxu0 %v581
        %642 = vmatprep.subr.bf16.mxu0 0
        %643 = vmatpush1.bf16.msra.mxu0 %v582
        %644 = vmatprep.subr.bf16.mxu0 0
        %645 = vmatpush1.bf16.msra.mxu0 %v583
        %646 = vmatprep.subr.bf16.mxu0 0
        %647 = vmatpush1.bf16.msra.mxu0 %v584
        %648 = vmatprep.subr.bf16.mxu0 0
        %649 = vmatpush1.bf16.msra.mxu0 %v585
        %650 = vmatprep.mubr.bf16.mxu0 %v391
        %651 = vmatmul.mubr.bf16.gmra.mrb[0].mxu0 %v390
        %v652 = vpop.f32.mrb[0].mxu0
        %v653 = vadd.f32 0.0, %v652
        %v654 = vpop.f32.mrb[0].mxu0
        %v655 = vpop.f32.mrb[0].mxu0
        %v656 = vadd.f32 0.0, %v655
        %v657 = vpop.f32.mrb[0].mxu0
        %658 = vmatprep.mubr.bf16.mxu0 %v394
        %659 = vmatmul.mubr.bf16.gmra.mrb[0].mxu0 %v393
        %v660 = vpop.f32.mrb[0].mxu0
        %v661 = vadd.f32 0.0, %v660
        %v662 = vpop.f32.mrb[0].mxu0
        %v663 = vpop.f32.mrb[0].mxu0
        %v664 = vadd.f32 0.0, %v663
        %v665 = vpop.f32.mrb[0].mxu0
        %666 = vmatprep.mubr.bf16.mxu0 %v397
        %667 = vmatmul.mubr.bf16.gmra.mrb[0].mxu0 %v396
        %v668 = vpop.f32.mrb[0].mxu0
        %v669 = vadd.f32 0.0, %v668
        %v670 = vpop.f32.mrb[0].mxu0
        %v671 = vpop.f32.mrb[0].mxu0
        %v672 = vadd.f32 0.0, %v671
        %v673 = vpop.f32.mrb[0].mxu0
        %674 = vmatprep.mubr.bf16.mxu0 %v400
        %675 = vmatmul.mubr.bf16.gmra.mrb[0].mxu0 %v399
        %v676 = vpop.f32.mrb[0].mxu0
        %v677 = vadd.f32 0.0, %v676
        %v678 = vpop.f32.mrb[0].mxu0
        %v679 = vpop.f32.mrb[0].mxu0
        %v680 = vadd.f32 0.0, %v679
        %v681 = vpop.f32.mrb[0].mxu0
        %682 = vmatprep.mubr.bf16.mxu0 %v403
        %683 = vmatmul.mubr.bf16.gmra.mrb[0].mxu0 %v402
        %v684 = vpop.f32.mrb[0].mxu0
        %v685 = vadd.f32 0.0, %v684
        %v686 = vpop.f32.mrb[0].mxu0
        %v687 = vpop.f32.mrb[0].mxu0
        %v688 = vadd.f32 0.0, %v687
        %v689 = vpop.f32.mrb[0].mxu0
        %690 = vmatprep.mubr.bf16.mxu0 %v406
        %691 = vmatmul.mubr.bf16.gmra.mrb[0].mxu0 %v405
        %v692 = vpop.f32.mrb[0].mxu0
        %v693 = vadd.f32 0.0, %v692
        %v694 = vpop.f32.mrb[0].mxu0
        %v695 = vpop.f32.mrb[0].mxu0
        %v696 = vadd.f32 0.0, %v695
        %v697 = vpop.f32.mrb[0].mxu0
        %698 = vmatprep.mubr.bf16.mxu0 %v409
        %699 = vmatmul.mubr.bf16.gmra.mrb[0].mxu0 %v408
        %v700 = vpop.f32.mrb[0].mxu0
        %v701 = vadd.f32 0.0, %v700
        %v702 = vpop.f32.mrb[0].mxu0
        %v703 = vpop.f32.mrb[0].mxu0
        %v704 = vadd.f32 0.0, %v703
        %v705 = vpop.f32.mrb[0].mxu0
        %706 = vmatprep.mubr.bf16.mxu0 %v412
        %707 = vmatmul.mubr.bf16.gmra.mrb[0].mxu0 %v411
        %v708 = vpop.f32.mrb[0].mxu0
        %v709 = vadd.f32 0.0, %v708
        %v710 = vpop.f32.mrb[0].mxu0
        %v711 = vpop.f32.mrb[0].mxu0
        %v712 = vadd.f32 0.0, %v711
        %v713 = vpop.f32.mrb[0].mxu0
        %714 = vmatprep.mubr.bf16.mxu0 %v415
        %715 = vmatmul.mubr.bf16.gmra.mrb[0].mxu0 %v414
        %v716 = vpop.f32.mrb[0].mxu0
        %v717 = vadd.f32 0.0, %v716
        %v718 = vpop.f32.mrb[0].mxu0
        %v719 = vpop.f32.mrb[0].mxu0
        %v720 = vadd.f32 0.0, %v719
        %v721 = vpop.f32.mrb[0].mxu0
        %722 = vmatprep.mubr.bf16.mxu0 %v418
        %723 = vmatmul.mubr.bf16.gmra.mrb[0].mxu0 %v417
        %v724 = vpop.f32.mrb[0].mxu0
        %v725 = vadd.f32 0.0, %v724
        %v726 = vpop.f32.mrb[0].mxu0
        %v727 = vpop.f32.mrb[0].mxu0
        %v728 = vadd.f32 0.0, %v727
        %v729 = vpop.f32.mrb[0].mxu0
        %730 = vmatprep.mubr.bf16.mxu0 %v421
        %731 = vmatmul.mubr.bf16.gmra.mrb[0].mxu0 %v420
        %v732 = vpop.f32.mrb[0].mxu0
        %v733 = vadd.f32 0.0, %v732
        %v734 = vpop.f32.mrb[0].mxu0
        %v735 = vpop.f32.mrb[0].mxu0
        %v736 = vadd.f32 0.0, %v735
        %v737 = vpop.f32.mrb[0].mxu0
        %738 = vmatprep.mubr.bf16.mxu0 %v424
        %739 = vmatmul.mubr.bf16.gmra.mrb[0].mxu0 %v423
        %v740 = vpop.f32.mrb[0].mxu0
        %v741 = vadd.f32 0.0, %v740
        %v742 = vpop.f32.mrb[0].mxu0
        %v743 = vpop.f32.mrb[0].mxu0
        %v744 = vadd.f32 0.0, %v743
        %v745 = vpop.f32.mrb[0].mxu0
        %746 = vdwg.mxu0
        %747 = vmatprep.subr.bf16.mxu0 0
        %748 = vmatpush1.bf16.msra.mxu0 %v586
        %749 = vmatprep.subr.bf16.mxu0 0
        %750 = vmatpush1.bf16.msra.mxu0 %v587
        %751 = vmatprep.subr.bf16.mxu0 0
        %752 = vmatpush1.bf16.msra.mxu0 %v588
        %753 = vmatprep.subr.bf16.mxu0 0
        %754 = vmatpush1.bf16.msra.mxu0 %v589
        %755 = vmatprep.subr.bf16.mxu0 0
        %756 = vmatpush1.bf16.msra.mxu0 %v590
        %757 = vmatprep.subr.bf16.mxu0 0
        %758 = vmatpush1.bf16.msra.mxu0 %v591
        %759 = vmatprep.subr.bf16.mxu0 0
        %760 = vmatpush1.bf16.msra.mxu0 %v592
        %761 = vmatprep.subr.bf16.mxu0 0
        %762 = vmatpush1.bf16.msra.mxu0 %v593
        %763 = vmatprep.subr.bf16.mxu0 0
        %764 = vmatpush1.bf16.msra.mxu0 0
        %765 = vmatprep.subr.bf16.mxu0 0
        %766 = vmatpush1.bf16.msra.mxu0 0
        %767 = vmatprep.subr.bf16.mxu0 0
        %768 = vmatpush1.bf16.msra.mxu0 0
        %769 = vmatprep.subr.bf16.mxu0 0
        %770 = vmatpush1.bf16.msra.mxu0 0
        %771 = vmatprep.subr.bf16.mxu0 0
        %772 = vmatpush1.bf16.msra.mxu0 0
        %773 = vmatprep.subr.bf16.mxu0 0
        %774 = vmatpush1.bf16.msra.mxu0 0
        %775 = vmatprep.subr.bf16.mxu0 0
        %776 = vmatpush1.bf16.msra.mxu0 0
        %777 = vmatprep.subr.bf16.mxu0 0
        %778 = vmatpush1.bf16.msra.mxu0 0
        %779 = vmatprep.mubr.bf16.mxu0 0
        %780 = vmatmul.mubr.bf16.gmra.mrb[0].mxu0 %v392
        %v781 = vpop.f32.mrb[0].mxu0
        %v782 = vadd.f32 %v653, %v781
        %v783 = vpop.f32.mrb[0].mxu0
        %v784 = vpop.f32.mrb[0].mxu0
        %v785 = vadd.f32 %v656, %v784
        %v786 = vpop.f32.mrb[0].mxu0
        %787 = vmatprep.mubr.bf16.mxu0 0
        %788 = vmatmul.mubr.bf16.gmra.mrb[0].mxu0 %v395
        %v789 = vpop.f32.mrb[0].mxu0
        %v790 = vadd.f32 %v661, %v789
        %v791 = vpop.f32.mrb[0].mxu0
        %v792 = vpop.f32.mrb[0].mxu0
        %v793 = vadd.f32 %v664, %v792
        %v794 = vpop.f32.mrb[0].mxu0
        %795 = vmatprep.mubr.bf16.mxu0 0
        %796 = vmatmul.mubr.bf16.gmra.mrb[0].mxu0 %v398
        %v797 = vpop.f32.mrb[0].mxu0
        %v798 = vadd.f32 %v669, %v797
        %v799 = vpop.f32.mrb[0].mxu0
        %v800 = vpop.f32.mrb[0].mxu0
        %v801 = vadd.f32 %v672, %v800
        %v802 = vpop.f32.mrb[0].mxu0
        %803 = vmatprep.mubr.bf16.mxu0 0
        %804 = vmatmul.mubr.bf16.gmra.mrb[0].mxu0 %v401
        %v805 = vpop.f32.mrb[0].mxu0
        %v806 = vadd.f32 %v677, %v805
        %v807 = vpop.f32.mrb[0].mxu0
        %v808 = vpop.f32.mrb[0].mxu0
        %v809 = vadd.f32 %v680, %v808
        %v810 = vpop.f32.mrb[0].mxu0
        %811 = vmatprep.mubr.bf16.mxu0 0
        %812 = vmatmul.mubr.bf16.gmra.mrb[0].mxu0 %v404
        %v813 = vpop.f32.mrb[0].mxu0
        %v814 = vadd.f32 %v685, %v813
        %v815 = vpop.f32.mrb[0].mxu0
        %v816 = vpop.f32.mrb[0].mxu0
        %v817 = vadd.f32 %v688, %v816
        %v818 = vpop.f32.mrb[0].mxu0
        %819 = vmatprep.mubr.bf16.mxu0 0
        %820 = vmatmul.mubr.bf16.gmra.mrb[0].mxu0 %v407
        %v821 = vpop.f32.mrb[0].mxu0
        %v822 = vadd.f32 %v693, %v821
        %v823 = vpop.f32.mrb[0].mxu0
        %v824 = vpop.f32.mrb[0].mxu0
        %v825 = vadd.f32 %v696, %v824
        %v826 = vpop.f32.mrb[0].mxu0
        %827 = vmatprep.mubr.bf16.mxu0 0
        %828 = vmatmul.mubr.bf16.gmra.mrb[0].mxu0 %v410
        %v829 = vpop.f32.mrb[0].mxu0
        %v830 = vadd.f32 %v701, %v829
        %v831 = vpop.f32.mrb[0].mxu0
        %v832 = vpop.f32.mrb[0].mxu0
        %v833 = vadd.f32 %v704, %v832
        %v834 = vpop.f32.mrb[0].mxu0
        %835 = vmatprep.mubr.bf16.mxu0 0
        %836 = vmatmul.mubr.bf16.gmra.mrb[0].mxu0 %v413
        %v837 = vpop.f32.mrb[0].mxu0
        %v838 = vadd.f32 %v709, %v837
        %v839 = vpop.f32.mrb[0].mxu0
        %v840 = vpop.f32.mrb[0].mxu0
        %v841 = vadd.f32 %v712, %v840
        %v842 = vpop.f32.mrb[0].mxu0
        %843 = vmatprep.mubr.bf16.mxu0 0
        %844 = vmatmul.mubr.bf16.gmra.mrb[0].mxu0 %v416
        %v845 = vpop.f32.mrb[0].mxu0
        %v846 = vadd.f32 %v717, %v845
        %v847 = vpop.f32.mrb[0].mxu0
        %v848 = vpop.f32.mrb[0].mxu0
        %v849 = vadd.f32 %v720, %v848
        %v850 = vpop.f32.mrb[0].mxu0
        %851 = vmatprep.mubr.bf16.mxu0 0
        %852 = vmatmul.mubr.bf16.gmra.mrb[0].mxu0 %v419
        %v853 = vpop.f32.mrb[0].mxu0
        %v854 = vadd.f32 %v725, %v853
        %v855 = vpop.f32.mrb[0].mxu0
        %v856 = vpop.f32.mrb[0].mxu0
        %v857 = vadd.f32 %v728, %v856
        %v858 = vpop.f32.mrb[0].mxu0
        %859 = vmatprep.mubr.bf16.mxu0 0
        %860 = vmatmul.mubr.bf16.gmra.mrb[0].mxu0 %v422
        %v861 = vpop.f32.mrb[0].mxu0
        %v862 = vadd.f32 %v733, %v861
        %v863 = vpop.f32.mrb[0].mxu0
        %v864 = vpop.f32.mrb[0].mxu0
        %v865 = vadd.f32 %v736, %v864
        %v866 = vpop.f32.mrb[0].mxu0
        %867 = vmatprep.mubr.bf16.mxu0 0
        %868 = vmatmul.mubr.bf16.gmra.mrb[0].mxu0 %v425
        %v869 = vpop.f32.mrb[0].mxu0
        %v870 = vadd.f32 %v741, %v869
        %v871 = vpop.f32.mrb[0].mxu0
        %v872 = vpop.f32.mrb[0].mxu0
        %v873 = vadd.f32 %v744, %v872
        %v874 = vpop.f32.mrb[0].mxu0
        %875 = vdwg.mxu0
        %v876 = vadd.f32 %v294, %v782
        %v877 = vadd.f32 %v295, %v785
        %v878 = vadd.f32 %v296, %v790
        %v879 = vadd.f32 %v297, %v793
        %v880 = vadd.f32 %v298, %v798
        %v881 = vadd.f32 %v299, %v801
        %v882 = vadd.f32 %v300, %v806
        %v883 = vadd.f32 %v301, %v809
        %v884 = vadd.f32 %v302, %v814
        %v885 = vadd.f32 %v303, %v817
        %v886 = vadd.f32 %v304, %v822
        %v887 = vadd.f32 %v305, %v825
        %v888 = vadd.f32 %v306, %v830
        %v889 = vadd.f32 %v307, %v833
        %v890 = vadd.f32 %v308, %v838
        %v891 = vadd.f32 %v309, %v841
        %v892 = vadd.f32 %v310, %v846
        %v893 = vadd.f32 %v311, %v849
        %v894 = vadd.f32 %v312, %v854
        %v895 = vadd.f32 %v313, %v857
        %v896 = vadd.f32 %v314, %v862
        %v897 = vadd.f32 %v315, %v865
        %v898 = vadd.f32 %v316, %v870
        %v899 = vadd.f32 %v317, %v873
        %900 = vst [vmem:[#allocation2] sm:$0xff] %v876
        %901 = vst [vmem:[#allocation2 + $0x8] sm:$0xff] %v877
        %902 = vst [vmem:[#allocation2 + $0x10] sm:$0xff] %v878
        %903 = vst [vmem:[#allocation2 + $0x18] sm:$0xff] %v879
        %904 = vst [vmem:[#allocation2 + $0x20] sm:$0xff] %v880
        %905 = vst [vmem:[#allocation2 + $0x28] sm:$0xff] %v881
        %906 = vst [vmem:[#allocation2 + $0x30] sm:$0xff] %v882
        %907 = vst [vmem:[#allocation2 + $0x38] sm:$0xff] %v883
        %908 = vst [vmem:[#allocation2 + $0x40] sm:$0xff] %v884
        %909 = vst [vmem:[#allocation2 + $0x48] sm:$0xff] %v885
        %910 = vst [vmem:[#allocation2 + $0x50] sm:$0xff] %v886
        %911 = vst [vmem:[#allocation2 + $0x58] sm:$0xff] %v887
        %912 = vst [vmem:[#allocation2 + $0x60] sm:$0xff] %v888
        %913 = vst [vmem:[#allocation2 + $0x68] sm:$0xff] %v889
        %914 = vst [vmem:[#allocation2 + $0x70] sm:$0xff] %v890
        %915 = vst [vmem:[#allocation2 + $0x78] sm:$0xff] %v891
        %916 = vst [vmem:[#allocation2 + $0x80] sm:$0xff] %v892
        %917 = vst [vmem:[#allocation2 + $0x88] sm:$0xff] %v893
        %918 = vst [vmem:[#allocation2 + $0x90] sm:$0xff] %v894
        %919 = vst [vmem:[#allocation2 + $0x98] sm:$0xff] %v895
        %920 = vst [vmem:[#allocation2 + $0xa0] sm:$0xff] %v896
        %921 = vst [vmem:[#allocation2 + $0xa8] sm:$0xff] %v897
        %922 = vst [vmem:[#allocation2 + $0xb0] sm:$0xff] %v898
        %923 = vst [vmem:[#allocation2 + $0xb8] sm:$0xff] %v899
        // Predicated region
        $region53: #{tpu_custom_call.1} parent=35 // pred_check
          %p924 = pneg %p266
        $region54: #{tpu_custom_call.1} parent=35 // pred_check_branch
          %926 = sbr.rel (%p924) target = $region56
        $region55: #{tpu_custom_call.1} parent=35 // pred_region
          %v927 = vld [vmem:[#allocation2] sm:$0xff]
          %v928 = vld [vmem:[#allocation2 + $0x8] sm:$0xff]
          %v929 = vld [vmem:[#allocation2 + $0x10] sm:$0xff]
          %v930 = vld [vmem:[#allocation2 + $0x18] sm:$0xff]
          %v931 = vld [vmem:[#allocation2 + $0x20] sm:$0xff]
          %v932 = vld [vmem:[#allocation2 + $0x28] sm:$0xff]
          %v933 = vld [vmem:[#allocation2 + $0x30] sm:$0xff]
          %v934 = vld [vmem:[#allocation2 + $0x38] sm:$0xff]
          %v935 = vld [vmem:[#allocation2 + $0x40] sm:$0xff]
          %v936 = vld [vmem:[#allocation2 + $0x48] sm:$0xff]
          %v937 = vld [vmem:[#allocation2 + $0x50] sm:$0xff]
          %v938 = vld [vmem:[#allocation2 + $0x58] sm:$0xff]
          %v939 = vld [vmem:[#allocation2 + $0x60] sm:$0xff]
          %v940 = vld [vmem:[#allocation2 + $0x68] sm:$0xff]
          %v941 = vld [vmem:[#allocation2 + $0x70] sm:$0xff]
          %v942 = vld [vmem:[#allocation2 + $0x78] sm:$0xff]
          %v943 = vld [vmem:[#allocation2 + $0x80] sm:$0xff]
          %v944 = vld [vmem:[#allocation2 + $0x88] sm:$0xff]
          %v945 = vld [vmem:[#allocation2 + $0x90] sm:$0xff]
          %v946 = vld [vmem:[#allocation2 + $0x98] sm:$0xff]
          %v947 = vld [vmem:[#allocation2 + $0xa0] sm:$0xff]
          %v948 = vld [vmem:[#allocation2 + $0xa8] sm:$0xff]
          %v949 = vld [vmem:[#allocation2 + $0xb0] sm:$0xff]
          %v950 = vld [vmem:[#allocation2 + $0xb8] sm:$0xff]
          %v951 = vpack.c.bf16 %v928, %v927
          %v952 = vpack.c.bf16 %v930, %v929
          %v953 = vpack.c.bf16 %v932, %v931
          %v954 = vpack.c.bf16 %v934, %v933
          %v955 = vpack.c.bf16 %v936, %v935
          %v956 = vpack.c.bf16 %v938, %v937
          %v957 = vpack.c.bf16 %v940, %v939
          %v958 = vpack.c.bf16 %v942, %v941
          %v959 = vpack.c.bf16 %v944, %v943
          %v960 = vpack.c.bf16 %v946, %v945
          %v961 = vpack.c.bf16 %v948, %v947
          %v962 = vpack.c.bf16 %v950, %v949
          %v963 = vld [vmem:[#allocation8] sm:$0xf]
          %v964 = vld [vmem:[#allocation8 + $0x4] sm:$0xf]
          %v965 = vld [vmem:[#allocation8 + $0x8] sm:$0xf]
          %v966 = vld [vmem:[#allocation8 + $0xc] sm:$0xf]
          %v967 = vld [vmem:[#allocation8 + $0x10] sm:$0xf]
          %v968 = vld [vmem:[#allocation8 + $0x14] sm:$0xf]
          %v969 = vld [vmem:[#allocation8 + $0x18] sm:$0xf]
          %v970 = vld [vmem:[#allocation8 + $0x1c] sm:$0xf]
          %v971 = vld [vmem:[#allocation8 + $0x20] sm:$0xf]
          %v972 = vld [vmem:[#allocation8 + $0x24] sm:$0xf]
          %v973 = vld [vmem:[#allocation8 + $0x28] sm:$0xf]
          %v974 = vld [vmem:[#allocation8 + $0x2c] sm:$0xf]
          %v975 = vld [vmem:[#allocation8 + $0x30] sm:$0xf]
          %v976 = vld [vmem:[#allocation8 + $0x34] sm:$0xf]
          %v977 = vld [vmem:[#allocation8 + $0x38] sm:$0xf]
          %v978 = vld [vmem:[#allocation8 + $0x3c] sm:$0xf]
          %v979 = vld [vmem:[%s3] sm:$0x1]
          %v981 = vlaneseq
          %v982 = vshrl.u32 %v981, 7
          %v983 = vsub.s32 0, %v982
          %v984 = vrot.slane %v979, %v983
          %v1002 = vunpack.c.l.b16 %v963
          %v1003 = vunpack.c.l.b16 %v964
          %v1004 = vunpack.c.l.b16 %v965
          %v1005 = vunpack.c.l.b16 %v966
          %v1006 = vunpack.c.l.b16 %v967
          %v1007 = vunpack.c.l.b16 %v968
          %v1008 = vunpack.c.l.b16 %v969
          %v1009 = vunpack.c.l.b16 %v970
          %v1010 = vunpack.c.l.b16 %v971
          %v1011 = vunpack.c.l.b16 %v972
          %v1012 = vunpack.c.l.b16 %v973
          %v1013 = vunpack.c.l.b16 %v974
          %v1014 = vunpack.c.l.b16 %v975
          %v1015 = vunpack.c.l.b16 %v976
          %v1016 = vunpack.c.l.b16 %v977
          %v1017 = vunpack.c.l.b16 %v978
          %v1018 = vpack.c.b16 %v1003, %v1002
          %v1019 = vpack.c.b16 %v1005, %v1004
          %v1020 = vpack.c.b16 %v1007, %v1006
          %v1021 = vpack.c.b16 %v1009, %v1008
          %v1022 = vpack.c.b16 %v1011, %v1010
          %v1023 = vpack.c.b16 %v1013, %v1012
          %v1024 = vpack.c.b16 %v1015, %v1014
          %v1025 = vpack.c.b16 %v1017, %v1016
          %1034 = vmatprep.subr.bf16.mxu0 0
          %1035 = vmatpush1.bf16.msra.mxu0 %v1018
          %1036 = vmatprep.subr.bf16.mxu0 0
          %1037 = vmatpush1.bf16.msra.mxu0 %v1019
          %1038 = vmatprep.subr.bf16.mxu0 0
          %1039 = vmatpush1.bf16.msra.mxu0 %v1020
          %1040 = vmatprep.subr.bf16.mxu0 0
          %1041 = vmatpush1.bf16.msra.mxu0 %v1021
          %1042 = vmatprep.subr.bf16.mxu0 0
          %1043 = vmatpush1.bf16.msra.mxu0 %v1022
          %1044 = vmatprep.subr.bf16.mxu0 0
          %1045 = vmatpush1.bf16.msra.mxu0 %v1023
          %1046 = vmatprep.subr.bf16.mxu0 0
          %1047 = vmatpush1.bf16.msra.mxu0 %v1024
          %1048 = vmatprep.subr.bf16.mxu0 0
          %1049 = vmatpush1.bf16.msra.mxu0 %v1025
          %1050 = vmatprep.subr.bf16.mxu0 0
          %1051 = vmatpush1.bf16.msra.mxu0 0
          %1052 = vmatprep.subr.bf16.mxu0 0
          %1053 = vmatpush1.bf16.msra.mxu0 0
          %1054 = vmatprep.subr.bf16.mxu0 0
          %1055 = vmatpush1.bf16.msra.mxu0 0
          %1056 = vmatprep.subr.bf16.mxu0 0
          %1057 = vmatpush1.bf16.msra.mxu0 0
          %1058 = vmatprep.subr.bf16.mxu0 0
          %1059 = vmatpush1.bf16.msra.mxu0 0
          %1060 = vmatprep.subr.bf16.mxu0 0
          %1061 = vmatpush1.bf16.msra.mxu0 0
          %1062 = vmatprep.subr.bf16.mxu0 0
          %1063 = vmatpush1.bf16.msra.mxu0 0
          %1064 = vmatprep.subr.bf16.mxu0 0
          %1065 = vmatpush1.bf16.msra.mxu0 0
          %1066 = vmatprep.mubr.bf16.mxu0 0
          %1067 = vmatmul.mubr.bf16.gmra.mrb[0].mxu0 %v951
          %v1068 = vpop.f32.mrb[0].mxu0
          %v1069 = vadd.f32 %v984, %v1068
          %v1070 = vpop.f32.mrb[0].mxu0
          %v1071 = vpop.f32.mrb[0].mxu0
          %v1072 = vadd.f32 %v984, %v1071
          %v1073 = vpop.f32.mrb[0].mxu0
          %1074 = vmatprep.mubr.bf16.mxu0 0
          %1075 = vmatmul.mubr.bf16.gmra.mrb[0].mxu0 %v952
          %v1076 = vpop.f32.mrb[0].mxu0
          %v1077 = vadd.f32 %v984, %v1076
          %v1078 = vpop.f32.mrb[0].mxu0
          %v1079 = vpop.f32.mrb[0].mxu0
          %v1080 = vadd.f32 %v984, %v1079
          %v1081 = vpop.f32.mrb[0].mxu0
          %1082 = vmatprep.mubr.bf16.mxu0 0
          %1083 = vmatmul.mubr.bf16.gmra.mrb[0].mxu0 %v953
          %v1084 = vpop.f32.mrb[0].mxu0
          %v1085 = vadd.f32 %v984, %v1084
          %v1086 = vpop.f32.mrb[0].mxu0
          %v1087 = vpop.f32.mrb[0].mxu0
          %v1088 = vadd.f32 %v984, %v1087
          %v1089 = vpop.f32.mrb[0].mxu0
          %1090 = vmatprep.mubr.bf16.mxu0 0
          %1091 = vmatmul.mubr.bf16.gmra.mrb[0].mxu0 %v954
          %v1092 = vpop.f32.mrb[0].mxu0
          %v1093 = vadd.f32 %v984, %v1092
          %v1094 = vpop.f32.mrb[0].mxu0
          %v1095 = vpop.f32.mrb[0].mxu0
          %v1096 = vadd.f32 %v984, %v1095
          %v1097 = vpop.f32.mrb[0].mxu0
          %1098 = vmatprep.mubr.bf16.mxu0 0
          %1099 = vmatmul.mubr.bf16.gmra.mrb[0].mxu0 %v955
          %v1100 = vpop.f32.mrb[0].mxu0
          %v1101 = vadd.f32 %v984, %v1100
          %v1102 = vpop.f32.mrb[0].mxu0
          %v1103 = vpop.f32.mrb[0].mxu0
          %v1104 = vadd.f32 %v984, %v1103
          %v1105 = vpop.f32.mrb[0].mxu0
          %1106 = vmatprep.mubr.bf16.mxu0 0
          %1107 = vmatmul.mubr.bf16.gmra.mrb[0].mxu0 %v956
          %v1108 = vpop.f32.mrb[0].mxu0
          %v1109 = vadd.f32 %v984, %v1108
          %v1110 = vpop.f32.mrb[0].mxu0
          %v1111 = vpop.f32.mrb[0].mxu0
          %v1112 = vadd.f32 %v984, %v1111
          %v1113 = vpop.f32.mrb[0].mxu0
          %1114 = vmatprep.mubr.bf16.mxu0 0
          %1115 = vmatmul.mubr.bf16.gmra.mrb[0].mxu0 %v957
          %v1116 = vpop.f32.mrb[0].mxu0
          %v1117 = vadd.f32 %v984, %v1116
          %v1118 = vpop.f32.mrb[0].mxu0
          %v1119 = vpop.f32.mrb[0].mxu0
          %v1120 = vadd.f32 %v984, %v1119
          %v1121 = vpop.f32.mrb[0].mxu0
          %1122 = vmatprep.mubr.bf16.mxu0 0
          %1123 = vmatmul.mubr.bf16.gmra.mrb[0].mxu0 %v958
          %v1124 = vpop.f32.mrb[0].mxu0
          %v1125 = vadd.f32 %v984, %v1124
          %v1126 = vpop.f32.mrb[0].mxu0
          %v1127 = vpop.f32.mrb[0].mxu0
          %v1128 = vadd.f32 %v984, %v1127
          %v1129 = vpop.f32.mrb[0].mxu0
          %1130 = vmatprep.mubr.bf16.mxu0 0
          %1131 = vmatmul.mubr.bf16.gmra.mrb[0].mxu0 %v959
          %v1132 = vpop.f32.mrb[0].mxu0
          %v1133 = vadd.f32 %v984, %v1132
          %v1134 = vpop.f32.mrb[0].mxu0
          %v1135 = vpop.f32.mrb[0].mxu0
          %v1136 = vadd.f32 %v984, %v1135
          %v1137 = vpop.f32.mrb[0].mxu0
          %1138 = vmatprep.mubr.bf16.mxu0 0
          %1139 = vmatmul.mubr.bf16.gmra.mrb[0].mxu0 %v960
          %v1140 = vpop.f32.mrb[0].mxu0
          %v1141 = vadd.f32 %v984, %v1140
          %v1142 = vpop.f32.mrb[0].mxu0
          %v1143 = vpop.f32.mrb[0].mxu0
          %v1144 = vadd.f32 %v984, %v1143
          %v1145 = vpop.f32.mrb[0].mxu0
          %1146 = vmatprep.mubr.bf16.mxu0 0
          %1147 = vmatmul.mubr.bf16.gmra.mrb[0].mxu0 %v961
          %v1148 = vpop.f32.mrb[0].mxu0
          %v1149 = vadd.f32 %v984, %v1148
          %v1150 = vpop.f32.mrb[0].mxu0
          %v1151 = vpop.f32.mrb[0].mxu0
          %v1152 = vadd.f32 %v984, %v1151
          %v1153 = vpop.f32.mrb[0].mxu0
          %1154 = vmatprep.mubr.bf16.mxu0 0
          %1155 = vmatmul.mubr.bf16.gmra.mrb[0].mxu0 %v962
          %v1156 = vpop.f32.mrb[0].mxu0
          %v1157 = vadd.f32 %v984, %v1156
          %v1158 = vpop.f32.mrb[0].mxu0
          %v1159 = vpop.f32.mrb[0].mxu0
          %v1160 = vadd.f32 %v984, %v1159
          %v1161 = vpop.f32.mrb[0].mxu0
          %1162 = vdwg.mxu0
          %1163 = vst [vmem:[%s261] sm:$0xff] %v1069
          %1164 = vst [vmem:[%s261 + $0x8] sm:$0xff] %v1072
          %1165 = vst [vmem:[%s261 + $0x10] sm:$0xff] %v1077
          %1166 = vst [vmem:[%s261 + $0x18] sm:$0xff] %v1080
          %1167 = vst [vmem:[%s261 + $0x20] sm:$0xff] %v1085
          %1168 = vst [vmem:[%s261 + $0x28] sm:$0xff] %v1088
          %1169 = vst [vmem:[%s261 + $0x30] sm:$0xff] %v1093
          %1170 = vst [vmem:[%s261 + $0x38] sm:$0xff] %v1096
          %1171 = vst [vmem:[%s261 + $0x40] sm:$0xff] %v1101
          %1172 = vst [vmem:[%s261 + $0x48] sm:$0xff] %v1104
          %1173 = vst [vmem:[%s261 + $0x50] sm:$0xff] %v1109
          %1174 = vst [vmem:[%s261 + $0x58] sm:$0xff] %v1112
          %1175 = vst [vmem:[%s261 + $0x60] sm:$0xff] %v1117
          %1176 = vst [vmem:[%s261 + $0x68] sm:$0xff] %v1120
          %1177 = vst [vmem:[%s261 + $0x70] sm:$0xff] %v1125
          %1178 = vst [vmem:[%s261 + $0x78] sm:$0xff] %v1128
          %1179 = vst [vmem:[%s261 + $0x80] sm:$0xff] %v1133
          %1180 = vst [vmem:[%s261 + $0x88] sm:$0xff] %v1136
          %1181 = vst [vmem:[%s261 + $0x90] sm:$0xff] %v1141
          %1182 = vst [vmem:[%s261 + $0x98] sm:$0xff] %v1144
          %1183 = vst [vmem:[%s261 + $0xa0] sm:$0xff] %v1149
          %1184 = vst [vmem:[%s261 + $0xa8] sm:$0xff] %v1152
          %1185 = vst [vmem:[%s261 + $0xb0] sm:$0xff] %v1157
          %1186 = vst [vmem:[%s261 + $0xb8] sm:$0xff] %v1160
        $region56: #{tpu_custom_call.1} parent=35 // pred_fallthru
          _
        %s1187 = sand.u32 %s133, 1
        %s1188 = scalar_lea.sflag [#allocation5], %s1187
        %s1189 = sand.u32 %s133, 1
        %s1190 = smul.addr %s1189, 192
        %s1191 = scalar_lea.vmem [#allocation9], %s1190
        // Predicated region
        $region57: #{tpu_custom_call.1} parent=35 // pred_check
          %p1192 = pneg %p143
        $region58: #{tpu_custom_call.1} parent=35 // pred_check_branch
          %1194 = sbr.rel (%p1192) target = $region60
        $region59: #{tpu_custom_call.1} parent=35 // pred_region
          %s1195 = smul.u32 24, %s26
          %s1197 = ssub.s32 3072, 3072
          %1198 = vsyncadd %s1188, %s1197
          %s1199 = smul.addr %s1195, 128
          %s1200 = scalar_lea.hbm %s4, %s1199
          %s1201 = sshll.u32 %s1191, 4
          %s1202 = int_to_ptr.vmem [resolvable:$true] %s1201
          %1207 = dma.vmem_to_hbm [thread:$0]  %s1202, 3072, %s1200, %s1188, 128, 128, 8
        $region60: #{tpu_custom_call.1} parent=35 // pred_fallthru
          _
      $region36: #{tpu_custom_call.1} parent=5 // pred_fallthru
        _
      %p1208 = scmp.le.s32.totalorder 2, %s17
      // Predicated region
      $region61: #{tpu_custom_call.1} parent=5 // pred_check
        %p1209 = pneg %p1208
      $region62: #{tpu_custom_call.1} parent=5 // pred_check_branch
        %1211 = sbr.rel (%p1209) target = $region64
      $region63: #{tpu_custom_call.1} parent=5 // pred_region
        %s1212 = ssub.s32 %s17, 2
        // Predicated region
        $region65: #{tpu_custom_call.1} parent=63 // pred_check
          %p1213 = pneg %p149
        $region66: #{tpu_custom_call.1} parent=63 // pred_check_branch
          %1215 = sbr.rel (%p1213) target = $region68
        $region67: #{tpu_custom_call.1} parent=63 // pred_region
          %s1216 = sand.u32 %s134, 1
          %s1217 = scalar_lea.sflag [#allocation5], %s1216
          %s1218 = sand.u32 %s134, 1
          %s1219 = smul.addr %s1218, 192
          %s1220 = scalar_lea.vmem [#allocation9], %s1219
          %1221 = dma.done %s1217, 3072
        $region68: #{tpu_custom_call.1} parent=63 // pred_fallthru
          _
      $region64: #{tpu_custom_call.1} parent=5 // pred_fallthru
        _
    $region6: #{tpu_custom_call.1} parent=1 // loop_footer
      %s21 = sadd.s32 1, %s17
    $region7: #{tpu_custom_call.1} parent=1 // loop_footer_branch
      %16 = sbr.rel target = $region3
    $region8: #{tpu_custom_call.1} parent=1 // loop_exit
      _
    %1222 = vsyncpa [#allocation4], 1
    %s1223 = scalar_lea.sflag [#allocation4], 1
    %1224 = vsyncpa %s1223, 1
    %1225 = vsyncpa [#allocation7], 1
    %1226 = vsyncpa [#allocation5], 1
    %s1227 = scalar_lea.sflag [#allocation5], 1
    %1228 = vsyncpa %s1227, 1

</llo_original>
